<compile_context>
chip_gen: v7x
topology: tpu7x:2x2x1
jax: 0.10.0
libtpu: 0.0.40
codegen_flags: <defaults>
</compile_context>

<pallas_src>
import functools

import jax
import jax.numpy as jnp
from jax.experimental import pallas as pl
from jax.experimental.pallas import tpu as pltpu


def _dist_value_head_kernel(x_ref, w_ref, b_ref, v_ref, logits_ref, slab_ref,
                            *, mean_col):
    # Cast to bf16 in-kernel (free VPU filler) and accumulate in f32 on the MXU.
    x = x_ref[...].astype(jnp.bfloat16)          # [TB, D]
    w = w_ref[...].astype(jnp.bfloat16)          # [D, A_pad]
    b = b_ref[...]                               # [1, A_pad] f32 (-inf on padded cols)
    v = v_ref[...]                               # [1, A_pad] f32 (0 on padded cols)

    logits = jnp.dot(x, w, preferred_element_type=jnp.float32) + b   # [TB, A_pad]
    logits_ref[...] = logits

    # Numerically-stable softmax over the atom axis.  Padded columns are -inf,
    # so exp() is exactly 0 there and they contribute no probability mass.
    m = jnp.max(logits, axis=-1, keepdims=True)
    e = jnp.exp(logits - m)
    s = jnp.sum(e, axis=-1, keepdims=True)
    probs = e * pl.reciprocal(s, approx=False)            # exact for the probs output

    # Expected value: sum(p * values).  approx recip -> EUP, effectively free.
    mean = jnp.sum(e * v, axis=-1, keepdims=True) * pl.reciprocal(s, approx=True)

    # Pack the per-row mean into a spare padded lane of the lane-dense probs slab
    # instead of emitting a separate width-1 (masked-store) output.
    col = jax.lax.broadcasted_iota(jnp.int32, probs.shape, dimension=1)
    slab_ref[...] = jnp.where(col == mean_col, mean, probs)


def distributional_value_head(x, w_t, bias, values, *, tb=256):
    """Forward pass of DistributionalValueHead.

    Args:
      x:      [B, D] inputs.
      w_t:    [D, A] transposed torch Linear weight.
      bias:   [A]    Linear bias.
      values: [A]    distribution support (linspace(vmin, vmax, num_atoms)).
    Returns:
      (logits [B, A], probabilities [B, A], mean [B]).
    """
    B, D = x.shape
    A = w_t.shape[1]

    # Pad the atom axis to a lane-dense width, always keeping >=1 spare column
    # to carry the packed per-row mean.
    A_pad = ((A + 127) // 128) * 128
    if A_pad == A:
        A_pad += 128
    mean_col = A  # first padded column

    w_pad = jnp.zeros((D, A_pad), w_t.dtype).at[:, :A].set(w_t)
    b_pad = jnp.full((1, A_pad), -jnp.inf, jnp.float32).at[0, :A].set(
        bias.astype(jnp.float32))
    v_pad = jnp.zeros((1, A_pad), jnp.float32).at[0, :A].set(
        values.astype(jnp.float32))

    # Batch tiling: TB rows per grid step (multiple of 8 sublanes); pad B up to it.
    tb = max(8, ((min(tb, max(B, 1)) + 7) // 8) * 8)
    B_pad = ((B + tb - 1) // tb) * tb
    x_in = x if B_pad == B else jnp.zeros((B_pad, D), x.dtype).at[:B].set(x)
    grid = (B_pad // tb,)

    x_isz = jnp.dtype(x.dtype).itemsize
    w_isz = jnp.dtype(w_t.dtype).itemsize
    cost = pl.CostEstimate(
        flops=2 * B_pad * D * A_pad,
        transcendentals=B_pad * A_pad,
        bytes_accessed=(B_pad * D * x_isz + D * A_pad * w_isz
                        + 2 * A_pad * 4 + 2 * B_pad * A_pad * 4),
    )
    # VMEM budget: double-buffered x tile + 2 double-buffered output tiles
    # + resident W/bias/values, with headroom; capped below v7x's 64 MiB.
    vmem_bytes = (2 * tb * D * 4 + 2 * 2 * tb * A_pad * 4
                  + 2 * D * A_pad * 4 + 4 * A_pad * 4) + (4 << 20)
    vmem_bytes = int(min(max(vmem_bytes, 4 << 20), 64 << 20))

    logits_pad, slab = pl.pallas_call(
        functools.partial(_dist_value_head_kernel, mean_col=mean_col),
        out_shape=(
            jax.ShapeDtypeStruct((B_pad, A_pad), jnp.float32),   # logits (padded)
            jax.ShapeDtypeStruct((B_pad, A_pad), jnp.float32),   # probs + packed mean
        ),
        grid=grid,
        in_specs=[
            pl.BlockSpec((tb, D), lambda i: (i, 0)),        # x: tiled over batch
            pl.BlockSpec((D, A_pad), lambda i: (0, 0)),     # W: resident across steps
            pl.BlockSpec((1, A_pad), lambda i: (0, 0)),     # bias: resident
            pl.BlockSpec((1, A_pad), lambda i: (0, 0)),     # values: resident
        ],
        out_specs=(
            pl.BlockSpec((tb, A_pad), lambda i: (i, 0)),
            pl.BlockSpec((tb, A_pad), lambda i: (i, 0)),
        ),
        compiler_params=pltpu.CompilerParams(
            dimension_semantics=("parallel",),
            vmem_limit_bytes=vmem_bytes,
        ),
        cost_estimate=cost,
    )(x_in, w_pad, b_pad, v_pad)

    logits = logits_pad[:B, :A]
    probs = slab[:B, :A]
    mean = slab[:B, mean_col]
    return logits, probs, mean


if __name__ == "__main__":
    # Module config (synthetic, deterministic): vmin=-10, vmax=10, num_atoms=51,
    # input_size=32, batch=8.
    vmin, vmax, num_atoms = -10.0, 10.0, 51
    input_size, batch = 32, 8

    values = jnp.linspace(vmin, vmax, num_atoms, dtype=jnp.float32)

    key = jax.random.PRNGKey(0)
    kx, kw, kb = jax.random.split(key, 3)
    # Mimic torch.nn.Linear default init: U(-1/sqrt(fan_in), 1/sqrt(fan_in)).
    bound = 1.0 / jnp.sqrt(jnp.float32(input_size))
    x = jax.random.normal(kx, (batch, input_size), dtype=jnp.float32)
    w_t = jax.random.uniform(kw, (input_size, num_atoms), jnp.float32, -bound, bound)
    bias = jax.random.uniform(kb, (num_atoms,), jnp.float32, -bound, bound)

    logits, probs, mean = distributional_value_head(x, w_t, bias, values)
    jax.block_until_ready((logits, probs, mean))

    # Pure-JAX f32 reference of the module semantics.  Tolerances account for the
    # bf16-fed MXU matmul (f32 accumulation) used on v6e/v7x.
    ref_logits = x @ w_t + bias
    ref_probs = jax.nn.softmax(ref_logits, axis=-1)
    ref_mean = jnp.sum(ref_probs * values, axis=-1)
    assert logits.shape == (batch, num_atoms) and probs.shape == (batch, num_atoms)
    assert jnp.allclose(logits, ref_logits, atol=3e-2), "logits mismatch"
    assert jnp.allclose(probs, ref_probs, atol=2e-3), "probabilities mismatch"
    assert jnp.allclose(mean, ref_mean, atol=5e-2), "mean mismatch"
    # Padded atoms must carry zero probability: sliced rows still sum to ~1.
    assert jnp.allclose(jnp.sum(probs, axis=-1), 1.0, atol=1e-5), "prob mass leaked to padding"
    assert bool(jnp.all(jnp.isfinite(probs))) and bool(jnp.all(jnp.isfinite(mean)))

    # TODO(synk): CategoricalWithSupport.project() (C51 target projection) is not
    # part of forward(); it is left to plain JAX if needed.
    print("KERNEL_OK")
</pallas_src>

<mosaic_0001>
module attributes {stable_mosaic.version = 11 : i64} {
  func.func @_dist_value_head_kernel(%arg0: i32, %arg1: memref<8x32xf32, #tpu.memory_space<vmem>>, %arg2: memref<32x128xf32, #tpu.memory_space<vmem>>, %arg3: memref<1x128xf32, #tpu.memory_space<vmem>>, %arg4: memref<1x128xf32, #tpu.memory_space<vmem>>, %arg5: memref<8x128xf32, #tpu.memory_space<vmem>>, %arg6: memref<8x128xf32, #tpu.memory_space<vmem>>) attributes {dimension_semantics = [#tpu.dimension_semantics<parallel>], iteration_bounds = array<i64: 1>, scalar_prefetch = 0 : i64, scratch_operands = 0 : i64, tpu.core_type = #tpu.core_type<tc>, window_params = [{transform_indices = @transform_0, window_bounds = array<i64: 8, 32>}, {pipeline_mode = #tpu.pipeline_mode<synchronous>, transform_indices = @transform_1, window_bounds = array<i64: 32, 128>}, {pipeline_mode = #tpu.pipeline_mode<synchronous>, transform_indices = @transform_2, window_bounds = array<i64: 1, 128>}, {pipeline_mode = #tpu.pipeline_mode<synchronous>, transform_indices = @transform_3, window_bounds = array<i64: 1, 128>}, {transform_indices = @transform_4, window_bounds = array<i64: 8, 128>}, {transform_indices = @transform_5, window_bounds = array<i64: 8, 128>}]} {
    %c0 = arith.constant 0 : index
    %c0_0 = arith.constant 0 : index
    %0 = vector.load %arg1[%c0, %c0_0] : memref<8x32xf32, #tpu.memory_space<vmem>>, vector<8x32xf32>
    %1 = arith.truncf %0 : vector<8x32xf32> to vector<8x32xbf16>
    %c0_1 = arith.constant 0 : index
    %c0_2 = arith.constant 0 : index
    %2 = vector.load %arg2[%c0_1, %c0_2] : memref<32x128xf32, #tpu.memory_space<vmem>>, vector<32x128xf32>
    %3 = arith.truncf %2 : vector<32x128xf32> to vector<32x128xbf16>
    %c0_3 = arith.constant 0 : index
    %c0_4 = arith.constant 0 : index
    %4 = vector.load %arg3[%c0_3, %c0_4] : memref<1x128xf32, #tpu.memory_space<vmem>>, vector<1x128xf32>
    %c0_5 = arith.constant 0 : index
    %c0_6 = arith.constant 0 : index
    %5 = vector.load %arg4[%c0_5, %c0_6] : memref<1x128xf32, #tpu.memory_space<vmem>>, vector<1x128xf32>
    %cst = arith.constant dense<0.000000e+00> : vector<8x128xf32>
    %6 = tpu.matmul %1, %3, %cst {dimension_numbers = #tpu.dot_dimension_numbers<[1], [0], [0], [1], [0, 0, 1, 1], [], []>} : vector<8x32xbf16>, vector<32x128xbf16>, vector<8x128xf32> -> vector<8x128xf32>
    %7 = vector.broadcast %4 : vector<1x128xf32> to vector<8x128xf32>
    %8 = arith.addf %6, %7 : vector<8x128xf32>
    %c0_7 = arith.constant 0 : index
    %c0_8 = arith.constant 0 : index
    %9 = vector.load %arg5[%c0_7, %c0_8] : memref<8x128xf32, #tpu.memory_space<vmem>>, vector<8x128xf32>
    tpu.vector_store %arg5[%c0_7, %c0_8], %8 {strides = array<i32>} : memref<8x128xf32, #tpu.memory_space<vmem>>, vector<8x128xf32>,
    %cst_9 = arith.constant dense<0xFF800000> : vector<8xf32>
    %10 = vector.multi_reduction <maximumf>, %8, %cst_9 [1] : vector<8x128xf32> to vector<8xf32>
    %11 = vector.shape_cast %10 : vector<8xf32> to vector<8x1xf32>
    %12 = vector.broadcast %11 : vector<8x1xf32> to vector<8x128xf32>
    %13 = arith.subf %8, %12 : vector<8x128xf32>
    %14 = math.exp %13 : vector<8x128xf32>
    %cst_10 = arith.constant dense<0.000000e+00> : vector<8xf32>
    %15 = vector.multi_reduction <add>, %14, %cst_10 [1] : vector<8x128xf32> to vector<8xf32>
    %16 = vector.shape_cast %15 : vector<8xf32> to vector<8x1xf32>
    %17 = tpu.reciprocal %16 : vector<8x1xf32> -> vector<8x1xf32>
    %18 = vector.broadcast %17 : vector<8x1xf32> to vector<8x128xf32>
    %19 = arith.mulf %14, %18 : vector<8x128xf32>
    %20 = vector.broadcast %5 : vector<1x128xf32> to vector<8x128xf32>
    %21 = arith.mulf %14, %20 : vector<8x128xf32>
    %cst_11 = arith.constant dense<0.000000e+00> : vector<8xf32>
    %22 = vector.multi_reduction <add>, %21, %cst_11 [1] : vector<8x128xf32> to vector<8xf32>
    %23 = vector.shape_cast %22 : vector<8xf32> to vector<8x1xf32>
    %24 = tpu.reciprocal %16 {approx = true} : vector<8x1xf32> -> vector<8x1xf32>
    %25 = arith.mulf %23, %24 : vector<8x1xf32>
    %26 = tpu.iota {dimensions = array<i32: 1>} : vector<8x128xi32>
    %c51_i32 = arith.constant 51 : i32
    %27 = vector.broadcast %c51_i32 : i32 to vector<8x128xi32>
    %28 = arith.cmpi eq, %26, %27 : vector<8x128xi32>
    %29 = vector.shape_cast %25 : vector<8x1xf32> to vector<8x1xf32>
    %30 = vector.broadcast %29 : vector<8x1xf32> to vector<8x128xf32>
    %31 = arith.select %28, %30, %19 : vector<8x128xi1>, vector<8x128xf32>
    %c0_12 = arith.constant 0 : index
    %c0_13 = arith.constant 0 : index
    %32 = vector.load %arg6[%c0_12, %c0_13] : memref<8x128xf32, #tpu.memory_space<vmem>>, vector<8x128xf32>
    tpu.vector_store %arg6[%c0_12, %c0_13], %31 {strides = array<i32>} : memref<8x128xf32, #tpu.memory_space<vmem>>, vector<8x128xf32>,
    return
  }
  func.func @transform_0(%arg0: i32) -> (i32, i32) {
    %c0_i32 = arith.constant 0 : i32
    %c0_i32_0 = arith.constant 0 : i32
    return %arg0, %c0_i32 : i32, i32
  }
  func.func @transform_1(%arg0: i32) -> (i32, i32) {
    %c0_i32 = arith.constant 0 : i32
    %c0_i32_0 = arith.constant 0 : i32
    %c0_i32_1 = arith.constant 0 : i32
    return %c0_i32, %c0_i32_0 : i32, i32
  }
  func.func @transform_2(%arg0: i32) -> (i32, i32) {
    %c0_i32 = arith.constant 0 : i32
    %c0_i32_0 = arith.constant 0 : i32
    %c0_i32_1 = arith.constant 0 : i32
    return %c0_i32, %c0_i32_0 : i32, i32
  }
  func.func @transform_3(%arg0: i32) -> (i32, i32) {
    %c0_i32 = arith.constant 0 : i32
    %c0_i32_0 = arith.constant 0 : i32
    %c0_i32_1 = arith.constant 0 : i32
    return %c0_i32, %c0_i32_0 : i32, i32
  }
  func.func @transform_4(%arg0: i32) -> (i32, i32) {
    %c0_i32 = arith.constant 0 : i32
    %c0_i32_0 = arith.constant 0 : i32
    return %arg0, %c0_i32 : i32, i32
  }
  func.func @transform_5(%arg0: i32) -> (i32, i32) {
    %c0_i32 = arith.constant 0 : i32
    %c0_i32_0 = arith.constant 0 : i32
    return %arg0, %c0_i32 : i32, i32
  }
}

</mosaic_0001>

<llo_original>
// kernel: tpu_custom_call.1
$region0: #{tpu_custom_call.1}
  #allocation0 [shape = 'u32[]', space=smem, size = 0x4, offset = 0x4, fixed_abs, tag = 'smem constant byte address 0x4 - core index']
  #allocation1 [shape = 'u32[144,128]{1,0:T(1,128)}', space=vmem, size = 0x12000, scoped, tag = 'internal scratch']
  %s0 = inlined_call_operand.hbm [shape: f32[8,32], index: 0, kind: input, shape index: {}]
  %s1 = inlined_call_operand.hbm [shape: f32[32,128], index: 1, kind: input, shape index: {}]
  %s2 = inlined_call_operand.vmem [shape: f32[1,128], index: 2, kind: input, shape index: {}]
  %s3 = inlined_call_operand.vmem [shape: f32[1,128], index: 3, kind: input, shape index: {}]
  %s4 = inlined_call_operand.hbm [shape: f32[8,128], index: 4, kind: output, shape index: {0}]
  %s5 = inlined_call_operand.hbm [shape: f32[8,128], index: 5, kind: output, shape index: {1}]
  %6 = xla_tuple %s4, %s5
  %s7 = sld [smem:[#allocation0]]
  $region42: #{tpu_custom_call.1} parent=0
    _
  %s9 = ssub.s32 1, %s7
  %s10 = scalar_select 0, %s9, %s7
  $region1: #{tpu_custom_call.1} parent=0
    #allocation2 [shape = 'u8[4096]{0}', space=vmem, size = 0x1000, scoped, tag = 'input window, operand 0, single buffered']
    #allocation3 [shape = 's32[1]{0}', space=sflag, size = 0x4, scoped, tag = 'scoped memory for tpu_custom_call.1']
    #allocation4 [shape = 's32[1]{0}', space=sflag, size = 0x4, scoped, tag = 'scoped memory for tpu_custom_call.1']
    #allocation5 [shape = 'u8[16384]{0}', space=vmem, size = 0x4000, scoped, tag = 'input window, operand 1, single buffered']
    #allocation6 [shape = 's32[1]{0}', space=sflag, size = 0x4, scoped, tag = 'scoped memory for tpu_custom_call.1']
    #allocation7 [shape = 'u8[4096]{0}', space=vmem, size = 0x1000, scoped, tag = 'output window, operand 0, single buffered']
    #allocation8 [shape = 'u8[4096]{0}', space=vmem, size = 0x1000, scoped, tag = 'output window, operand 1, single buffered']
    #allocation9 [shape = 's32[1]{0}', space=sflag, size = 0x4, scoped, tag = 'scoped memory for tpu_custom_call.1']
    %11 = vsyncpa [#allocation3], 0
    %12 = vsyncpa [#allocation6], 0
    %13 = vsyncpa [#allocation4], 0
    %14 = vsyncpa [#allocation9], 0
    // Predicated region
    $region2: #{tpu_custom_call.1} parent=1 // pred_check
      _
    $region3: #{tpu_custom_call.1} parent=1 // pred_check_branch
      %16 = sbr.rel (0) target = $region5
    $region4: #{tpu_custom_call.1} parent=1 // pred_region
      %s18 = ssub.s32 128, 128
      %19 = vsyncadd [#allocation3], %s18
      %s21 = sshll.u32 [#allocation2], 4
      %s22 = int_to_ptr.vmem [resolvable:$true] %s21
      %24 = dma.hbm_to_vmem [thread:$0]  %s0, 128, %s22, [#allocation3]
    $region5: #{tpu_custom_call.1} parent=1 // pred_fallthru
      _
    // Predicated region
    $region6: #{tpu_custom_call.1} parent=1 // pred_check
      _
    $region7: #{tpu_custom_call.1} parent=1 // pred_check_branch
      %26 = sbr.rel (0) target = $region9
    $region8: #{tpu_custom_call.1} parent=1 // pred_region
      %s28 = ssub.s32 512, 512
      %29 = vsyncadd [#allocation6], %s28
      %s30 = sshll.u32 [#allocation5], 4
      %s31 = int_to_ptr.vmem [resolvable:$true] %s30
      %36 = dma.hbm_to_vmem [thread:$0]  %s1, 512, %s31, [#allocation6], 128, 128, 8
    $region9: #{tpu_custom_call.1} parent=1 // pred_fallthru
      _
    // Predicated region
    $region10: #{tpu_custom_call.1} parent=1 // pred_check
      _
    $region11: #{tpu_custom_call.1} parent=1 // pred_check_branch
      %38 = sbr.rel (0) target = $region13
    $region12: #{tpu_custom_call.1} parent=1 // pred_region
      _
    $region13: #{tpu_custom_call.1} parent=1 // pred_fallthru
      _
    // Predicated region
    $region14: #{tpu_custom_call.1} parent=1 // pred_check
      _
    $region15: #{tpu_custom_call.1} parent=1 // pred_check_branch
      %40 = sbr.rel (0) target = $region17
    $region16: #{tpu_custom_call.1} parent=1 // pred_region
      _
    $region17: #{tpu_custom_call.1} parent=1 // pred_fallthru
      _
    // Predicated region
    $region18: #{tpu_custom_call.1} parent=1 // pred_check
      _
    $region19: #{tpu_custom_call.1} parent=1 // pred_check_branch
      %42 = sbr.rel (0) target = $region21
    $region20: #{tpu_custom_call.1} parent=1 // pred_region
      %43 = dma.done [#allocation3], 128
    $region21: #{tpu_custom_call.1} parent=1 // pred_fallthru
      _
    // Predicated region
    $region22: #{tpu_custom_call.1} parent=1 // pred_check
      _
    $region23: #{tpu_custom_call.1} parent=1 // pred_check_branch
      %45 = sbr.rel (0) target = $region25
    $region24: #{tpu_custom_call.1} parent=1 // pred_region
      %46 = dma.done [#allocation6], 512
    $region25: #{tpu_custom_call.1} parent=1 // pred_fallthru
      _
    %v48 = vld [vmem:[#allocation2] sm:$0xff]
    %v49 = vpack.c.bf16 %v48, %v48
    %v50 = vld [vmem:[#allocation5] sm:$0xff]
    %v51 = vld [vmem:[#allocation5 + $0x8] sm:$0xff]
    %v52 = vld [vmem:[#allocation5 + $0x10] sm:$0xff]
    %v53 = vld [vmem:[#allocation5 + $0x18] sm:$0xff]
    %v54 = vpack.c.bf16 %v51, %v50
    %v55 = vpack.c.bf16 %v53, %v52
    %v56 = vld [vmem:[%s2] sm:$0x1]
    %v57 = vld [vmem:[%s3] sm:$0x1]
    %v59 = vlaneseq
    %v60 = vshrl.u32 %v59, 7
    %v61 = vsub.s32 0, %v60
    %v62 = vrot.slane %v56, %v61
    %vm64 = vcmask 261120
    %v66 = vsel %vm64, %v49, 0
    %68 = vmatprep.subr.bf16.mxu0 0
    %69 = vmatpush1.bf16.msra.mxu0 %v54
    %70 = vmatprep.subr.bf16.mxu0 0
    %71 = vmatpush1.bf16.msra.mxu0 %v55
    %72 = vmatprep.subr.bf16.mxu0 0
    %73 = vmatpush1.bf16.msra.mxu0 0
    %74 = vmatprep.subr.bf16.mxu0 0
    %75 = vmatpush1.bf16.msra.mxu0 0
    %76 = vmatprep.subr.bf16.mxu0 0
    %77 = vmatpush1.bf16.msra.mxu0 0
    %78 = vmatprep.subr.bf16.mxu0 0
    %79 = vmatpush1.bf16.msra.mxu0 0
    %80 = vmatprep.subr.bf16.mxu0 0
    %81 = vmatpush1.bf16.msra.mxu0 0
    %82 = vmatprep.subr.bf16.mxu0 0
    %83 = vmatpush1.bf16.msra.mxu0 0
    %84 = vmatprep.subr.bf16.mxu0 0
    %85 = vmatpush1.bf16.msra.mxu0 0
    %86 = vmatprep.subr.bf16.mxu0 0
    %87 = vmatpush1.bf16.msra.mxu0 0
    %88 = vmatprep.subr.bf16.mxu0 0
    %89 = vmatpush1.bf16.msra.mxu0 0
    %90 = vmatprep.subr.bf16.mxu0 0
    %91 = vmatpush1.bf16.msra.mxu0 0
    %92 = vmatprep.subr.bf16.mxu0 0
    %93 = vmatpush1.bf16.msra.mxu0 0
    %94 = vmatprep.subr.bf16.mxu0 0
    %95 = vmatpush1.bf16.msra.mxu0 0
    %96 = vmatprep.subr.bf16.mxu0 0
    %97 = vmatpush1.bf16.msra.mxu0 0
    %98 = vmatprep.subr.bf16.mxu0 0
    %99 = vmatpush1.bf16.msra.mxu0 0
    %100 = vmatprep.mubr.bf16.mxu0 0
    %101 = vmatmul.mubr.bf16.gmra.mrb[0].mxu0 %v66
    %v102 = vpop.f32.mrb[0].mxu0
    %v103 = vadd.f32 %v62, %v102
    %v104 = vpop.f32.mrb[0].mxu0
    %v105 = vpop.f32.mrb[0].mxu0
    %v106 = vpop.f32.mrb[0].mxu0
    %107 = vdwg.mxu0
    %108 = vst [vmem:[#allocation7] sm:$0xff] %v103
    %109 = vmax.xlane.f32.xlu0 %v103
    %v110 = vpop.xlane.xlu0 %109
    %v111 = vsub.f32 %v103, %v110
    %v112 = vmul.f32 %v111, 1.442695
    %v113 = vpow.pop %v112
    %114 = vadd.xlane.f32.xlu0 %v113
    %v115 = vpop.xlane.xlu0 %114
    %v116 = vrcp.pop %v115
    %v117 = vmul.f32 %v113, %v116
    %v119 = vlaneseq
    %v120 = vshrl.u32 %v119, 7
    %v121 = vsub.s32 0, %v120
    %v122 = vrot.slane %v57, %v121
    %v124 = vmul.f32 %v113, %v122
    %125 = vadd.xlane.f32.xlu0 %v124
    %v126 = vpop.xlane.xlu0 %125
    %v127 = vrcp.pop %v115
    %v128 = vmul.f32 %v126, %v127
    %v129 = vlaneseq
    %v130 = vand.u32 %v129, 127
    %vm131 = vcmp.eq.s32.totalorder %v130, 51
    %v132 = vsel %vm131, %v128, %v117
    %133 = vst [vmem:[#allocation8] sm:$0xff] %v132
    // Predicated region
    $region26: #{tpu_custom_call.1} parent=1 // pred_check
      _
    $region27: #{tpu_custom_call.1} parent=1 // pred_check_branch
      %135 = sbr.rel (0) target = $region29
    $region28: #{tpu_custom_call.1} parent=1 // pred_region
      %s137 = ssub.s32 128, 128
      %138 = vsyncadd [#allocation4], %s137
      %s140 = sshll.u32 [#allocation7], 4
      %s141 = int_to_ptr.vmem [resolvable:$true] %s140
      %143 = dma.vmem_to_hbm [thread:$0]  %s141, 128, %s4, [#allocation4]
    $region29: #{tpu_custom_call.1} parent=1 // pred_fallthru
      _
    // Predicated region
    $region30: #{tpu_custom_call.1} parent=1 // pred_check
      _
    $region31: #{tpu_custom_call.1} parent=1 // pred_check_branch
      %145 = sbr.rel (0) target = $region33
    $region32: #{tpu_custom_call.1} parent=1 // pred_region
      %s147 = ssub.s32 128, 128
      %148 = vsyncadd [#allocation9], %s147
      %s150 = sshll.u32 [#allocation8], 4
      %s151 = int_to_ptr.vmem [resolvable:$true] %s150
      %153 = dma.vmem_to_hbm [thread:$0]  %s151, 128, %s5, [#allocation9]
    $region33: #{tpu_custom_call.1} parent=1 // pred_fallthru
      _
    // Predicated region
    $region34: #{tpu_custom_call.1} parent=1 // pred_check
      _
    $region35: #{tpu_custom_call.1} parent=1 // pred_check_branch
      %155 = sbr.rel (0) target = $region37
    $region36: #{tpu_custom_call.1} parent=1 // pred_region
      %156 = dma.done [#allocation4], 128
    $region37: #{tpu_custom_call.1} parent=1 // pred_fallthru
      _
    // Predicated region
    $region38: #{tpu_custom_call.1} parent=1 // pred_check
      _
    $region39: #{tpu_custom_call.1} parent=1 // pred_check_branch
      %158 = sbr.rel (0) target = $region41
    $region40: #{tpu_custom_call.1} parent=1 // pred_region
      %159 = dma.done [#allocation9], 128
    $region41: #{tpu_custom_call.1} parent=1 // pred_fallthru
      _
    %160 = vsyncpa [#allocation3], 1
    %161 = vsyncpa [#allocation6], 1
    %162 = vsyncpa [#allocation4], 1
    %163 = vsyncpa [#allocation9], 1

</llo_original>
